<compile_context>
chip_gen: v5e
topology: v5e:2x2
jax: 0.10.0
libtpu: 0.0.40
codegen_flags: <defaults>
</compile_context>

<pallas_src>
import jax
import jax.numpy as jnp
from jax.experimental import pallas as pl
from jax.experimental.pallas import tpu as pltpu


def _round_up(x, m):
    return ((x + m - 1) // m) * m


# ----------------------------------------------------------------------------
# Hardware introspection (advisory only; conservative fallbacks if queries
# fail, e.g. interpret mode or unknown device kinds).
# ----------------------------------------------------------------------------
def _device_kind():
    try:
        return jax.devices()[0].device_kind.lower()
    except Exception:  # perf-hint query only; fall back to conservative defaults
        return ""


def _vmem_budget_bytes():
    # ~75% of physical VMEM: ~96 MiB on v5e/v6e (128 MiB), ~48 MiB on v7x (64 MiB).
    try:
        cap = int(pltpu.get_tpu_info().vmem_capacity_bytes)
    except Exception:  # perf-hint query only
        cap = 64 * 1024 * 1024  # conservative (v7x-sized) fallback
    return (3 * cap) // 4


def _num_tensorcores():
    # v7x has 2 TensorCores per chip; v5e/v6e have 1.
    return 2 if "v7" in _device_kind() else 1


def _default_compute_dtype():
    # bf16 inputs + f32 MXU accumulation is the fast path on v6e/v7x; keep f32
    # by default on v5e / unknown for exactness.
    kind = _device_kind()
    if "v6" in kind or "v7" in kind:
        return jnp.bfloat16
    return jnp.float32


# ----------------------------------------------------------------------------
# Kernel
# ----------------------------------------------------------------------------
def mlp2_kernel(x_ref, w1_ref, b1_ref, w2_ref, b2_ref, w3_ref, b3_ref, o_ref):
    # Three MXU matmuls with f32 accumulation; bias adds / ReLUs stay f32 on
    # the VPU. Activations are cast back to the weight dtype between layers so
    # the bf16 path keeps all three matmuls on the fast bf16 MXU pipeline
    # (no-op casts on the f32 path).
    f1 = jnp.dot(x_ref[...], w1_ref[...], preferred_element_type=jnp.float32)
    f1 = jnp.maximum(f1 + b1_ref[...], 0.0).astype(w2_ref.dtype)

    f2 = jnp.dot(f1, w2_ref[...], preferred_element_type=jnp.float32)
    f2 = jnp.maximum(f2 + b2_ref[...], 0.0).astype(w3_ref.dtype)

    f3 = jnp.dot(f2, w3_ref[...], preferred_element_type=jnp.float32)
    o_ref[...] = (f3 + b3_ref[...]).astype(o_ref.dtype)


# ----------------------------------------------------------------------------
# One-time parameter preparation (hoisted out of the forward path).
# ----------------------------------------------------------------------------
def prepare_params(w1, b1, w2, b2, w3, b3, *, compute_dtype=None):
    """Cast weights to the compute dtype, reshape biases to (1, dim) f32 rows
    (bias add happens post-accumulation in f32), and pad w3/b3 columns to a
    multiple of 128 so output stores are lane-dense. Returns (params, d_out)."""
    if compute_dtype is None:
        compute_dtype = _default_compute_dtype()
    d_out = w3.shape[1]
    n_pad = _round_up(d_out, 128)
    # TODO(synk): on v5e with very large B, benchmark the padded lane-dense
    # store (B x n_pad writeback) against a native-width masked store.
    w1c = jnp.asarray(w1, compute_dtype)
    w2c = jnp.asarray(w2, compute_dtype)
    w3c = jnp.pad(jnp.asarray(w3), ((0, 0), (0, n_pad - d_out))).astype(compute_dtype)
    b1r = jnp.asarray(b1, jnp.float32).reshape(1, -1)
    b2r = jnp.asarray(b2, jnp.float32).reshape(1, -1)
    b3r = jnp.pad(jnp.asarray(b3, jnp.float32), (0, n_pad - d_out)).reshape(1, n_pad)
    return (w1c, b1r, w2c, b2r, w3c, b3r), d_out


# ----------------------------------------------------------------------------
# Tile sizing
# ----------------------------------------------------------------------------
def _pick_batch_tile(B, d_in, d1, d2, n_pad, in_itemsize, out_itemsize,
                     vmem_budget_bytes, num_cores, x_buffers):
    """Largest batch tile whose working set fits ~85% of the VMEM budget,
    capped at 2048 rows and at the batch size."""
    # Weights + f32 biases, single-buffered (pl.Buffered(1)).
    fixed = (in_itemsize * (d_in * d1 + d1 * d2 + d2 * n_pad)
             + 4 * (d1 + d2 + n_pad))
    # Per batch row: x tile (x_buffers deep), out tile (double-buffered) and
    # the three f32 intermediates.
    per_row = (x_buffers * in_itemsize * d_in
               + 2 * out_itemsize * n_pad
               + 4 * (d1 + d2 + n_pad))
    usable = int(vmem_budget_bytes * 0.85) - fixed
    cap = max(usable // per_row, 8)
    tile = min(2048, cap)
    tile = min(tile, _round_up(B, 8))  # never larger than the batch
    if num_cores > 1:
        # Enough (and balanced) grid steps to feed every TensorCore.
        tile = min(tile, _round_up(pl.cdiv(B, num_cores), 8))
    return max(8, (int(tile) // 8) * 8)


# ----------------------------------------------------------------------------
# Forward
# ----------------------------------------------------------------------------
def mlp2_forward(x, params, d_out, *, batch_tile=None, out_dtype=None,
                 x_buffer_count=2):
    """Fused MLP2 forward. `params` must come from prepare_params()."""
    w1, b1r, w2, b2r, w3p, b3p = params
    out_dtype = x.dtype if out_dtype is None else out_dtype
    compute_dtype = w1.dtype
    x = x.astype(compute_dtype)

    B, D_in = x.shape
    D1 = w1.shape[1]
    D2 = w2.shape[1]
    N_pad = w3p.shape[1]

    vmem_budget = _vmem_budget_bytes()
    num_cores = _num_tensorcores()

    if batch_tile is None:
        batch_tile = _pick_batch_tile(
            B, D_in, D1, D2, N_pad,
            jnp.dtype(compute_dtype).itemsize, jnp.dtype(out_dtype).itemsize,
            vmem_budget, num_cores, x_buffer_count)
    batch_tile = max(8, (int(batch_tile) // 8) * 8)

    # Ragged batches: no wrapper-side pad of x. The last grid block may be
    # partial; compute is row-independent and OOB rows are never written back.
    grid = (pl.cdiv(B, batch_tile),)

    if num_cores > 1 and grid[0] >= num_cores:
        # Actually splits batch steps across v7x's two TensorCores
        # ("parallel" alone is a measured no-op for core sharding).
        dim_sem = (pltpu.CORE_PARALLEL,)
    else:
        dim_sem = (pltpu.ARBITRARY,)

    flops = 2 * B * (D_in * D1 + D1 * D2 + D2 * N_pad)
    bytes_accessed = (
        jnp.dtype(compute_dtype).itemsize
        * (B * D_in + D_in * D1 + D1 * D2 + D2 * N_pad)
        + 4 * (D1 + D2 + N_pad)
        + jnp.dtype(out_dtype).itemsize * B * N_pad)
    cost = pl.CostEstimate(flops=flops, transcendentals=0,
                           bytes_accessed=bytes_accessed)

    def _build(single_buffer_weights, dims):
        def const_spec(shape):
            # Grid-invariant operand (same block every step): single-buffer it
            # so weights don't pay a useless 2x VMEM footprint.
            if single_buffer_weights:
                return pl.BlockSpec(shape, lambda i: (0, 0),
                                    pipeline_mode=pl.Buffered(1))
            return pl.BlockSpec(shape, lambda i: (0, 0))

        if x_buffer_count == 2:
            x_spec = pl.BlockSpec((batch_tile, D_in), lambda i: (i, 0))
        else:
            # Deeper prefetch on the only per-step streamed operand.
            x_spec = pl.BlockSpec((batch_tile, D_in), lambda i: (i, 0),
                                  pipeline_mode=pl.Buffered(x_buffer_count))

        return pl.pallas_call(
            mlp2_kernel,
            out_shape=jax.ShapeDtypeStruct((B, N_pad), out_dtype),
            grid_spec=pltpu.PrefetchScalarGridSpec(
                num_scalar_prefetch=0,
                grid=grid,
                in_specs=[
                    x_spec,
                    const_spec((D_in, D1)), const_spec((1, D1)),
                    const_spec((D1, D2)), const_spec((1, D2)),
                    const_spec((D2, N_pad)), const_spec((1, N_pad)),
                ],
                out_specs=pl.BlockSpec((batch_tile, N_pad), lambda i: (i, 0)),
            ),
            compiler_params=pltpu.CompilerParams(
                dimension_semantics=dims,
                vmem_limit_bytes=int(vmem_budget),
            ),
            cost_estimate=cost,
        )

    args = (x, w1, b1r, w2, b2r, w3p, b3p)
    try:
        out = _build(True, dim_sem)(*args)
    except (pltpu.LoweringException, NotImplementedError):
        # Narrow fallback (don't swallow unrelated errors): retry with default
        # double-buffered pipelining and portable grid semantics if this jax /
        # hardware combination rejects Buffered(1) or CORE_PARALLEL.
        out = _build(False, (pltpu.ARBITRARY,))(*args)

    return out[:B, :d_out]


# ----------------------------------------------------------------------------
# Parameter init (mirrors MLP2.__init__ + reset_parameters) and a JAX ref.
# ----------------------------------------------------------------------------
def init_params(key, input_dim, output_dim, layer_dim1=2 ** 8, layer_dim2=2 ** 6):
    """torch.nn.init.kaiming_normal_ on a 2-D (in, out) tensor uses
    fan_in = size(1), so std = sqrt(2 / layer_dim) for weight1/weight2.
    weight3 stays standard normal; biases are zeros."""
    k1, k2, k3 = jax.random.split(key, 3)
    w1 = jax.random.normal(k1, (input_dim, layer_dim1), jnp.float32) * jnp.sqrt(
        2.0 / layer_dim1)
    b1 = jnp.zeros((layer_dim1,), jnp.float32)
    w2 = jax.random.normal(k2, (layer_dim1, layer_dim2), jnp.float32) * jnp.sqrt(
        2.0 / layer_dim2)
    b2 = jnp.zeros((layer_dim2,), jnp.float32)
    w3 = jax.random.normal(k3, (layer_dim2, output_dim), jnp.float32)
    b3 = jnp.zeros((output_dim,), jnp.float32)
    return w1, b1, w2, b2, w3, b3


def ref_forward(x, w1, b1, w2, b2, w3, b3, dtype=jnp.float32):
    """Plain-JAX reference, mirroring the kernel's dtype handling."""
    xd = x.astype(dtype)
    f1 = jnp.dot(xd, w1.astype(dtype), preferred_element_type=jnp.float32) + b1
    f1 = jnp.maximum(f1, 0.0).astype(dtype)
    f2 = jnp.dot(f1, w2.astype(dtype), preferred_element_type=jnp.float32) + b2
    f2 = jnp.maximum(f2, 0.0).astype(dtype)
    return jnp.dot(f2, w3.astype(dtype), preferred_element_type=jnp.float32) + b3


if __name__ == "__main__":
    key = jax.random.PRNGKey(0)
    kx, kp = jax.random.split(key)

    # Small demo shapes consistent with the module: batch=200 (ragged),
    # input_dim=32, output_dim=16, hidden dims = module defaults (256, 64).
    B, D_in, D_out = 200, 32, 16
    x = jax.random.normal(kx, (B, D_in), jnp.float32)
    w1, b1, w2, b2, w3, b3 = init_params(kp, D_in, D_out)

    # 1) Exact f32 path, auto batch tile (single grid step on 1-TC chips,
    #    two CORE_PARALLEL steps on v7x).
    params_f32, d_out = prepare_params(w1, b1, w2, b2, w3, b3,
                                       compute_dtype=jnp.float32)
    out = jax.block_until_ready(mlp2_forward(x, params_f32, d_out))
    ref = ref_forward(x, w1, b1, w2, b2, w3, b3, jnp.float32)
    assert out.shape == (B, D_out)
    assert jnp.allclose(out, ref, atol=2e-4, rtol=2e-4), float(
        jnp.max(jnp.abs(out - ref)))

    # 2) Generation-default compute dtype (bf16 on v6e/v7x, f32 elsewhere),
    #    forced small tile so the multi-step + ragged-last-block path runs.
    params_auto, d_out = prepare_params(w1, b1, w2, b2, w3, b3)
    out2 = jax.block_until_ready(
        mlp2_forward(x, params_auto, d_out, batch_tile=64))
    ref2 = ref_forward(x, w1, b1, w2, b2, w3, b3, params_auto[0].dtype)
    assert out2.shape == (B, D_out)
    assert jnp.allclose(out2.astype(jnp.float32), ref2.astype(jnp.float32),
                        atol=5e-2, rtol=5e-2)

    print("KERNEL_OK")
</pallas_src>

<mosaic_0001>
module attributes {stable_mosaic.version = 11 : i64} {
  func.func @mlp2_kernel(%arg0: i32, %arg1: memref<200x32xf32, #tpu.memory_space<vmem>>, %arg2: memref<32x256xf32, #tpu.memory_space<vmem>>, %arg3: memref<1x256xf32, #tpu.memory_space<vmem>>, %arg4: memref<256x64xf32, #tpu.memory_space<vmem>>, %arg5: memref<1x64xf32, #tpu.memory_space<vmem>>, %arg6: memref<64x128xf32, #tpu.memory_space<vmem>>, %arg7: memref<1x128xf32, #tpu.memory_space<vmem>>, %arg8: memref<200x128xf32, #tpu.memory_space<vmem>>) attributes {dimension_semantics = [#tpu.dimension_semantics<arbitrary>], iteration_bounds = array<i64: 1>, scalar_prefetch = 0 : i64, scratch_operands = 0 : i64, tpu.core_type = #tpu.core_type<tc>, window_params = [{transform_indices = @transform_0, window_bounds = array<i64: 200, 32>}, {pipeline_mode = #tpu.pipeline_mode<synchronous>, transform_indices = @transform_1, window_bounds = array<i64: 32, 256>}, {pipeline_mode = #tpu.pipeline_mode<synchronous>, transform_indices = @transform_2, window_bounds = array<i64: 1, 256>}, {pipeline_mode = #tpu.pipeline_mode<synchronous>, transform_indices = @transform_3, window_bounds = array<i64: 256, 64>}, {pipeline_mode = #tpu.pipeline_mode<synchronous>, transform_indices = @transform_4, window_bounds = array<i64: 1, 64>}, {pipeline_mode = #tpu.pipeline_mode<synchronous>, transform_indices = @transform_5, window_bounds = array<i64: 64, 128>}, {pipeline_mode = #tpu.pipeline_mode<synchronous>, transform_indices = @transform_6, window_bounds = array<i64: 1, 128>}, {transform_indices = @transform_7, window_bounds = array<i64: 200, 128>}]} {
    %c0 = arith.constant 0 : index
    %c0_0 = arith.constant 0 : index
    %0 = vector.load %arg1[%c0, %c0_0] : memref<200x32xf32, #tpu.memory_space<vmem>>, vector<200x32xf32>
    %c0_1 = arith.constant 0 : index
    %c0_2 = arith.constant 0 : index
    %1 = vector.load %arg2[%c0_1, %c0_2] : memref<32x256xf32, #tpu.memory_space<vmem>>, vector<32x256xf32>
    %cst = arith.constant dense<0.000000e+00> : vector<200x256xf32>
    %2 = tpu.matmul %0, %1, %cst {dimension_numbers = #tpu.dot_dimension_numbers<[1], [0], [0], [1], [0, 0, 1, 1], [], []>} : vector<200x32xf32>, vector<32x256xf32>, vector<200x256xf32> -> vector<200x256xf32>
    %c0_3 = arith.constant 0 : index
    %c0_4 = arith.constant 0 : index
    %3 = vector.load %arg3[%c0_3, %c0_4] : memref<1x256xf32, #tpu.memory_space<vmem>>, vector<1x256xf32>
    %4 = vector.broadcast %3 : vector<1x256xf32> to vector<200x256xf32>
    %5 = arith.addf %2, %4 : vector<200x256xf32>
    %cst_5 = arith.constant 0.000000e+00 : f32
    %6 = vector.broadcast %cst_5 : f32 to vector<200x256xf32>
    %7 = arith.maximumf %5, %6 : vector<200x256xf32>
    %c0_6 = arith.constant 0 : index
    %c0_7 = arith.constant 0 : index
    %8 = vector.load %arg4[%c0_6, %c0_7] : memref<256x64xf32, #tpu.memory_space<vmem>>, vector<256x64xf32>
    %cst_8 = arith.constant dense<0.000000e+00> : vector<200x64xf32>
    %9 = tpu.matmul %7, %8, %cst_8 {dimension_numbers = #tpu.dot_dimension_numbers<[1], [0], [0], [1], [0, 0, 1, 1], [], []>} : vector<200x256xf32>, vector<256x64xf32>, vector<200x64xf32> -> vector<200x64xf32>
    %c0_9 = arith.constant 0 : index
    %c0_10 = arith.constant 0 : index
    %10 = vector.load %arg5[%c0_9, %c0_10] : memref<1x64xf32, #tpu.memory_space<vmem>>, vector<1x64xf32>
    %11 = vector.broadcast %10 : vector<1x64xf32> to vector<200x64xf32>
    %12 = arith.addf %9, %11 : vector<200x64xf32>
    %cst_11 = arith.constant 0.000000e+00 : f32
    %13 = vector.broadcast %cst_11 : f32 to vector<200x64xf32>
    %14 = arith.maximumf %12, %13 : vector<200x64xf32>
    %c0_12 = arith.constant 0 : index
    %c0_13 = arith.constant 0 : index
    %15 = vector.load %arg6[%c0_12, %c0_13] : memref<64x128xf32, #tpu.memory_space<vmem>>, vector<64x128xf32>
    %cst_14 = arith.constant dense<0.000000e+00> : vector<200x128xf32>
    %16 = tpu.matmul %14, %15, %cst_14 {dimension_numbers = #tpu.dot_dimension_numbers<[1], [0], [0], [1], [0, 0, 1, 1], [], []>} : vector<200x64xf32>, vector<64x128xf32>, vector<200x128xf32> -> vector<200x128xf32>
    %c0_15 = arith.constant 0 : index
    %c0_16 = arith.constant 0 : index
    %17 = vector.load %arg7[%c0_15, %c0_16] : memref<1x128xf32, #tpu.memory_space<vmem>>, vector<1x128xf32>
    %18 = vector.broadcast %17 : vector<1x128xf32> to vector<200x128xf32>
    %19 = arith.addf %16, %18 : vector<200x128xf32>
    %c0_17 = arith.constant 0 : index
    %c0_18 = arith.constant 0 : index
    %20 = vector.load %arg8[%c0_17, %c0_18] : memref<200x128xf32, #tpu.memory_space<vmem>>, vector<200x128xf32>
    tpu.vector_store %arg8[%c0_17, %c0_18], %19 {strides = array<i32>} : memref<200x128xf32, #tpu.memory_space<vmem>>, vector<200x128xf32>,
    return
  }
  func.func @transform_0(%arg0: i32) -> (i32, i32) {
    %c0_i32 = arith.constant 0 : i32
    %c0_i32_0 = arith.constant 0 : i32
    return %arg0, %c0_i32 : i32, i32
  }
  func.func @transform_1(%arg0: i32) -> (i32, i32) {
    %c0_i32 = arith.constant 0 : i32
    %c0_i32_0 = arith.constant 0 : i32
    %c0_i32_1 = arith.constant 0 : i32
    return %c0_i32, %c0_i32_0 : i32, i32
  }
  func.func @transform_2(%arg0: i32) -> (i32, i32) {
    %c0_i32 = arith.constant 0 : i32
    %c0_i32_0 = arith.constant 0 : i32
    %c0_i32_1 = arith.constant 0 : i32
    return %c0_i32, %c0_i32_0 : i32, i32
  }
  func.func @transform_3(%arg0: i32) -> (i32, i32) {
    %c0_i32 = arith.constant 0 : i32
    %c0_i32_0 = arith.constant 0 : i32
    %c0_i32_1 = arith.constant 0 : i32
    return %c0_i32, %c0_i32_0 : i32, i32
  }
  func.func @transform_4(%arg0: i32) -> (i32, i32) {
    %c0_i32 = arith.constant 0 : i32
    %c0_i32_0 = arith.constant 0 : i32
    %c0_i32_1 = arith.constant 0 : i32
    return %c0_i32, %c0_i32_0 : i32, i32
  }
  func.func @transform_5(%arg0: i32) -> (i32, i32) {
    %c0_i32 = arith.constant 0 : i32
    %c0_i32_0 = arith.constant 0 : i32
    %c0_i32_1 = arith.constant 0 : i32
    return %c0_i32, %c0_i32_0 : i32, i32
  }
  func.func @transform_6(%arg0: i32) -> (i32, i32) {
    %c0_i32 = arith.constant 0 : i32
    %c0_i32_0 = arith.constant 0 : i32
    %c0_i32_1 = arith.constant 0 : i32
    return %c0_i32, %c0_i32_0 : i32, i32
  }
  func.func @transform_7(%arg0: i32) -> (i32, i32) {
    %c0_i32 = arith.constant 0 : i32
    %c0_i32_0 = arith.constant 0 : i32
    return %arg0, %c0_i32 : i32, i32
  }
}

</mosaic_0001>

<llo_original>
// kernel: tpu_custom_call.1
$region0: #{tpu_custom_call.1}
  #allocation0 [shape = 'u32[]', space=smem, size = 0x4, offset = 0x4, fixed_abs, tag = 'smem constant byte address 0x4 - core index']
  #allocation1 [shape = 'u32[72,128]{1,0:T(1,128)}', space=vmem, size = 0x9000, scoped, tag = 'internal scratch']
  %s0 = inlined_call_operand.vmem [shape: f32[200,32], index: 0, kind: input, shape index: {}]
  %s1 = inlined_call_operand.vmem [shape: f32[32,256], index: 1, kind: input, shape index: {}]
  %s2 = inlined_call_operand.vmem [shape: f32[1,256], index: 2, kind: input, shape index: {}]
  %s3 = inlined_call_operand.vmem [shape: f32[256,64], index: 3, kind: input, shape index: {}]
  %s4 = inlined_call_operand.vmem [shape: f32[1,64], index: 4, kind: input, shape index: {}]
  %s5 = inlined_call_operand.vmem [shape: f32[64,128], index: 5, kind: input, shape index: {}]
  %s6 = inlined_call_operand.vmem [shape: f32[1,128], index: 6, kind: input, shape index: {}]
  %s7 = inlined_call_operand.hbm [shape: f32[200,128], index: 7, kind: output, shape index: {}]
  %s8 = sld [smem:[#allocation0]]
  $region38: #{tpu_custom_call.1} parent=0
    _
  %s10 = ssub.s32 1, %s8
  %s11 = scalar_select 0, %s10, %s8
  $region1: #{tpu_custom_call.1} parent=0
    #allocation2 [shape = 'u8[102400]{0}', space=vmem, size = 0x19000, scoped, tag = 'output window, operand 0, single buffered']
    #allocation3 [shape = 's32[1]{0}', space=sflag, size = 0x4, scoped, tag = 'scoped memory for tpu_custom_call.1']
    %12 = vsyncpa [#allocation3], 0
    // Predicated region
    $region2: #{tpu_custom_call.1} parent=1 // pred_check
      _
    $region3: #{tpu_custom_call.1} parent=1 // pred_check_branch
      %14 = sbr.rel (0) target = $region5
    $region4: #{tpu_custom_call.1} parent=1 // pred_region
      _
    $region5: #{tpu_custom_call.1} parent=1 // pred_fallthru
      _
    // Predicated region
    $region6: #{tpu_custom_call.1} parent=1 // pred_check
      _
    $region7: #{tpu_custom_call.1} parent=1 // pred_check_branch
      %16 = sbr.rel (0) target = $region9
    $region8: #{tpu_custom_call.1} parent=1 // pred_region
      _
    $region9: #{tpu_custom_call.1} parent=1 // pred_fallthru
      _
    // Predicated region
    $region10: #{tpu_custom_call.1} parent=1 // pred_check
      _
    $region11: #{tpu_custom_call.1} parent=1 // pred_check_branch
      %18 = sbr.rel (0) target = $region13
    $region12: #{tpu_custom_call.1} parent=1 // pred_region
      _
    $region13: #{tpu_custom_call.1} parent=1 // pred_fallthru
      _
    // Predicated region
    $region14: #{tpu_custom_call.1} parent=1 // pred_check
      _
    $region15: #{tpu_custom_call.1} parent=1 // pred_check_branch
      %20 = sbr.rel (0) target = $region17
    $region16: #{tpu_custom_call.1} parent=1 // pred_region
      _
    $region17: #{tpu_custom_call.1} parent=1 // pred_fallthru
      _
    // Predicated region
    $region18: #{tpu_custom_call.1} parent=1 // pred_check
      _
    $region19: #{tpu_custom_call.1} parent=1 // pred_check_branch
      %22 = sbr.rel (0) target = $region21
    $region20: #{tpu_custom_call.1} parent=1 // pred_region
      _
    $region21: #{tpu_custom_call.1} parent=1 // pred_fallthru
      _
    // Predicated region
    $region22: #{tpu_custom_call.1} parent=1 // pred_check
      _
    $region23: #{tpu_custom_call.1} parent=1 // pred_check_branch
      %24 = sbr.rel (0) target = $region25
    $region24: #{tpu_custom_call.1} parent=1 // pred_region
      _
    $region25: #{tpu_custom_call.1} parent=1 // pred_fallthru
      _
    // Predicated region
    $region26: #{tpu_custom_call.1} parent=1 // pred_check
      _
    $region27: #{tpu_custom_call.1} parent=1 // pred_check_branch
      %26 = sbr.rel (0) target = $region29
    $region28: #{tpu_custom_call.1} parent=1 // pred_region
      _
    $region29: #{tpu_custom_call.1} parent=1 // pred_fallthru
      _
    %v27 = vld [vmem:[%s0] sm:$0xff]
    %v28 = vld [vmem:[%s0 + $0x8] sm:$0xff]
    %v29 = vld [vmem:[%s0 + $0x10] sm:$0xff]
    %v30 = vld [vmem:[%s0 + $0x18] sm:$0xff]
    %v31 = vld [vmem:[%s0 + $0x20] sm:$0xff]
    %v32 = vld [vmem:[%s0 + $0x28] sm:$0xff]
    %v33 = vld [vmem:[%s0 + $0x30] sm:$0xff]
    %v34 = vld [vmem:[%s0 + $0x38] sm:$0xff]
    %v35 = vld [vmem:[%s0 + $0x40] sm:$0xff]
    %v36 = vld [vmem:[%s0 + $0x48] sm:$0xff]
    %v37 = vld [vmem:[%s0 + $0x50] sm:$0xff]
    %v38 = vld [vmem:[%s0 + $0x58] sm:$0xff]
    %v39 = vld [vmem:[%s0 + $0x60] sm:$0xff]
    %v40 = vld [vmem:[%s0 + $0x68] sm:$0xff]
    %v41 = vld [vmem:[%s0 + $0x70] sm:$0xff]
    %v42 = vld [vmem:[%s0 + $0x78] sm:$0xff]
    %v43 = vld [vmem:[%s0 + $0x80] sm:$0xff]
    %v44 = vld [vmem:[%s0 + $0x88] sm:$0xff]
    %v45 = vld [vmem:[%s0 + $0x90] sm:$0xff]
    %v46 = vld [vmem:[%s0 + $0x98] sm:$0xff]
    %v47 = vld [vmem:[%s0 + $0xa0] sm:$0xff]
    %v48 = vld [vmem:[%s0 + $0xa8] sm:$0xff]
    %v49 = vld [vmem:[%s0 + $0xb0] sm:$0xff]
    %v50 = vld [vmem:[%s0 + $0xb8] sm:$0xff]
    %v51 = vld [vmem:[%s0 + $0xc0] sm:$0xff]
    %v52 = vld [vmem:[%s1] sm:$0xff]
    %v53 = vld [vmem:[%s1 + $0x8] sm:$0xff]
    %v54 = vld [vmem:[%s1 + $0x10] sm:$0xff]
    %v55 = vld [vmem:[%s1 + $0x18] sm:$0xff]
    %v56 = vld [vmem:[%s1 + $0x20] sm:$0xff]
    %v57 = vld [vmem:[%s1 + $0x28] sm:$0xff]
    %v58 = vld [vmem:[%s1 + $0x30] sm:$0xff]
    %v59 = vld [vmem:[%s1 + $0x38] sm:$0xff]
    %v60 = vld [vmem:[%s2] sm:$0x3]
    %v62 = vperm.slane %v60, 0
    %v63 = vperm.slane %v60, 1
    %vm66 = vcmask 261120
    %v68 = vsel %vm66, %v27, 0
    %v71 = vsel %vm66, %v28, 0
    %v74 = vsel %vm66, %v29, 0
    %v77 = vsel %vm66, %v30, 0
    %v80 = vsel %vm66, %v31, 0
    %v83 = vsel %vm66, %v32, 0
    %v86 = vsel %vm66, %v33, 0
    %v89 = vsel %vm66, %v34, 0
    %v92 = vsel %vm66, %v35, 0
    %v95 = vsel %vm66, %v36, 0
    %v98 = vsel %vm66, %v37, 0
    %v101 = vsel %vm66, %v38, 0
    %v104 = vsel %vm66, %v39, 0
    %v107 = vsel %vm66, %v40, 0
    %v110 = vsel %vm66, %v41, 0
    %v113 = vsel %vm66, %v42, 0
    %v116 = vsel %vm66, %v43, 0
    %v119 = vsel %vm66, %v44, 0
    %v122 = vsel %vm66, %v45, 0
    %v125 = vsel %vm66, %v46, 0
    %v128 = vsel %vm66, %v47, 0
    %v131 = vsel %vm66, %v48, 0
    %v134 = vsel %vm66, %v49, 0
    %v137 = vsel %vm66, %v50, 0
    %v140 = vsel %vm66, %v51, 0
    %142 = vmatpush.msra.mxu0 0.0
    %143 = vmatpush.msra.mxu0 0.0
    %144 = vmatpush.msra.mxu0 0.0
    %145 = vmatpush.msra.mxu0 0.0
    %146 = vmatpush.msra.mxu0 0.0
    %147 = vmatpush.msra.mxu0 0.0
    %148 = vmatpush.msra.mxu0 0.0
    %149 = vmatpush.msra.mxu0 0.0
    %150 = vmatpush.msra.mxu0 0.0
    %151 = vmatpush.msra.mxu0 0.0
    %152 = vmatpush.msra.mxu0 0.0
    %153 = vmatpush.msra.mxu0 0.0
    %154 = vmatpush.msra.mxu0 %v58
    %155 = vmatpush.msra.mxu0 %v56
    %156 = vmatpush.msra.mxu0 %v54
    %157 = vmatpush.msra.mxu0 %v52
    %158 = vmatmul.f32.gmra.mxu0 %v68
    %v159 = vpop.f32.mrf.mxu0
    %v160 = vadd.f32 %v62, %v159
    %161 = vmatmul.f32.gmra.mxu0 %v71
    %v162 = vpop.f32.mrf.mxu0
    %v163 = vadd.f32 %v62, %v162
    %164 = vmatmul.f32.gmra.mxu0 %v74
    %v165 = vpop.f32.mrf.mxu0
    %v166 = vadd.f32 %v62, %v165
    %167 = vmatmul.f32.gmra.mxu0 %v77
    %v168 = vpop.f32.mrf.mxu0
    %v169 = vadd.f32 %v62, %v168
    %170 = vmatmul.f32.gmra.mxu0 %v80
    %v171 = vpop.f32.mrf.mxu0
    %v172 = vadd.f32 %v62, %v171
    %173 = vmatmul.f32.gmra.mxu0 %v83
    %v174 = vpop.f32.mrf.mxu0
    %v175 = vadd.f32 %v62, %v174
    %176 = vmatmul.f32.gmra.mxu0 %v86
    %v177 = vpop.f32.mrf.mxu0
    %v178 = vadd.f32 %v62, %v177
    %179 = vmatmul.f32.gmra.mxu0 %v89
    %v180 = vpop.f32.mrf.mxu0
    %v181 = vadd.f32 %v62, %v180
    %182 = vmatmul.f32.gmra.mxu0 %v92
    %v183 = vpop.f32.mrf.mxu0
    %v184 = vadd.f32 %v62, %v183
    %185 = vmatmul.f32.gmra.mxu0 %v95
    %v186 = vpop.f32.mrf.mxu0
    %v187 = vadd.f32 %v62, %v186
    %188 = vmatmul.f32.gmra.mxu0 %v98
    %v189 = vpop.f32.mrf.mxu0
    %v190 = vadd.f32 %v62, %v189
    %191 = vmatmul.f32.gmra.mxu0 %v101
    %v192 = vpop.f32.mrf.mxu0
    %v193 = vadd.f32 %v62, %v192
    %194 = vmatmul.f32.gmra.mxu0 %v104
    %v195 = vpop.f32.mrf.mxu0
    %v196 = vadd.f32 %v62, %v195
    %197 = vmatmul.f32.gmra.mxu0 %v107
    %v198 = vpop.f32.mrf.mxu0
    %v199 = vadd.f32 %v62, %v198
    %200 = vmatmul.f32.gmra.mxu0 %v110
    %v201 = vpop.f32.mrf.mxu0
    %v202 = vadd.f32 %v62, %v201
    %203 = vmatmul.f32.gmra.mxu0 %v113
    %v204 = vpop.f32.mrf.mxu0
    %v205 = vadd.f32 %v62, %v204
    %206 = vmatmul.f32.gmra.mxu0 %v116
    %v207 = vpop.f32.mrf.mxu0
    %v208 = vadd.f32 %v62, %v207
    %209 = vmatmul.f32.gmra.mxu0 %v119
    %v210 = vpop.f32.mrf.mxu0
    %v211 = vadd.f32 %v62, %v210
    %212 = vmatmul.f32.gmra.mxu0 %v122
    %v213 = vpop.f32.mrf.mxu0
    %v214 = vadd.f32 %v62, %v213
    %215 = vmatmul.f32.gmra.mxu0 %v125
    %v216 = vpop.f32.mrf.mxu0
    %v217 = vadd.f32 %v62, %v216
    %218 = vmatmul.f32.gmra.mxu0 %v128
    %v219 = vpop.f32.mrf.mxu0
    %v220 = vadd.f32 %v62, %v219
    %221 = vmatmul.f32.gmra.mxu0 %v131
    %v222 = vpop.f32.mrf.mxu0
    %v223 = vadd.f32 %v62, %v222
    %224 = vmatmul.f32.gmra.mxu0 %v134
    %v225 = vpop.f32.mrf.mxu0
    %v226 = vadd.f32 %v62, %v225
    %227 = vmatmul.f32.gmra.mxu0 %v137
    %v228 = vpop.f32.mrf.mxu0
    %v229 = vadd.f32 %v62, %v228
    %230 = vmatmul.f32.gmra.mxu0 %v140
    %v231 = vpop.f32.mrf.mxu0
    %v232 = vadd.f32 %v62, %v231
    %233 = vdwg.mxu0
    %234 = vmatpush.msra.mxu0 0.0
    %235 = vmatpush.msra.mxu0 0.0
    %236 = vmatpush.msra.mxu0 0.0
    %237 = vmatpush.msra.mxu0 0.0
    %238 = vmatpush.msra.mxu0 0.0
    %239 = vmatpush.msra.mxu0 0.0
    %240 = vmatpush.msra.mxu0 0.0
    %241 = vmatpush.msra.mxu0 0.0
    %242 = vmatpush.msra.mxu0 0.0
    %243 = vmatpush.msra.mxu0 0.0
    %244 = vmatpush.msra.mxu0 0.0
    %245 = vmatpush.msra.mxu0 0.0
    %246 = vmatpush.msra.mxu0 %v59
    %247 = vmatpush.msra.mxu0 %v57
    %248 = vmatpush.msra.mxu0 %v55
    %249 = vmatpush.msra.mxu0 %v53
    %250 = vmatmul.f32.gmra.mxu0 %v68
    %v251 = vpop.f32.mrf.mxu0
    %v252 = vadd.f32 %v63, %v251
    %253 = vmatmul.f32.gmra.mxu0 %v71
    %v254 = vpop.f32.mrf.mxu0
    %v255 = vadd.f32 %v63, %v254
    %256 = vmatmul.f32.gmra.mxu0 %v74
    %v257 = vpop.f32.mrf.mxu0
    %v258 = vadd.f32 %v63, %v257
    %259 = vmatmul.f32.gmra.mxu0 %v77
    %v260 = vpop.f32.mrf.mxu0
    %v261 = vadd.f32 %v63, %v260
    %262 = vmatmul.f32.gmra.mxu0 %v80
    %v263 = vpop.f32.mrf.mxu0
    %v264 = vadd.f32 %v63, %v263
    %265 = vmatmul.f32.gmra.mxu0 %v83
    %v266 = vpop.f32.mrf.mxu0
    %v267 = vadd.f32 %v63, %v266
    %268 = vmatmul.f32.gmra.mxu0 %v86
    %v269 = vpop.f32.mrf.mxu0
    %v270 = vadd.f32 %v63, %v269
    %271 = vmatmul.f32.gmra.mxu0 %v89
    %v272 = vpop.f32.mrf.mxu0
    %v273 = vadd.f32 %v63, %v272
    %274 = vmatmul.f32.gmra.mxu0 %v92
    %v275 = vpop.f32.mrf.mxu0
    %v276 = vadd.f32 %v63, %v275
    %277 = vmatmul.f32.gmra.mxu0 %v95
    %v278 = vpop.f32.mrf.mxu0
    %v279 = vadd.f32 %v63, %v278
    %280 = vmatmul.f32.gmra.mxu0 %v98
    %v281 = vpop.f32.mrf.mxu0
    %v282 = vadd.f32 %v63, %v281
    %283 = vmatmul.f32.gmra.mxu0 %v101
    %v284 = vpop.f32.mrf.mxu0
    %v285 = vadd.f32 %v63, %v284
    %286 = vmatmul.f32.gmra.mxu0 %v104
    %v287 = vpop.f32.mrf.mxu0
    %v288 = vadd.f32 %v63, %v287
    %289 = vmatmul.f32.gmra.mxu0 %v107
    %v290 = vpop.f32.mrf.mxu0
    %v291 = vadd.f32 %v63, %v290
    %292 = vmatmul.f32.gmra.mxu0 %v110
    %v293 = vpop.f32.mrf.mxu0
    %v294 = vadd.f32 %v63, %v293
    %295 = vmatmul.f32.gmra.mxu0 %v113
    %v296 = vpop.f32.mrf.mxu0
    %v297 = vadd.f32 %v63, %v296
    %298 = vmatmul.f32.gmra.mxu0 %v116
    %v299 = vpop.f32.mrf.mxu0
    %v300 = vadd.f32 %v63, %v299
    %301 = vmatmul.f32.gmra.mxu0 %v119
    %v302 = vpop.f32.mrf.mxu0
    %v303 = vadd.f32 %v63, %v302
    %304 = vmatmul.f32.gmra.mxu0 %v122
    %v305 = vpop.f32.mrf.mxu0
    %v306 = vadd.f32 %v63, %v305
    %307 = vmatmul.f32.gmra.mxu0 %v125
    %v308 = vpop.f32.mrf.mxu0
    %v309 = vadd.f32 %v63, %v308
    %310 = vmatmul.f32.gmra.mxu0 %v128
    %v311 = vpop.f32.mrf.mxu0
    %v312 = vadd.f32 %v63, %v311
    %313 = vmatmul.f32.gmra.mxu0 %v131
    %v314 = vpop.f32.mrf.mxu0
    %v315 = vadd.f32 %v63, %v314
    %316 = vmatmul.f32.gmra.mxu0 %v134
    %v317 = vpop.f32.mrf.mxu0
    %v318 = vadd.f32 %v63, %v317
    %319 = vmatmul.f32.gmra.mxu0 %v137
    %v320 = vpop.f32.mrf.mxu0
    %v321 = vadd.f32 %v63, %v320
    %322 = vmatmul.f32.gmra.mxu0 %v140
    %v323 = vpop.f32.mrf.mxu0
    %v324 = vadd.f32 %v63, %v323
    %325 = vdwg.mxu0
    %v326 = vmax.f32 %v160, 0.0
    %v327 = vmax.f32 %v252, 0.0
    %v328 = vmax.f32 %v163, 0.0
    %v329 = vmax.f32 %v255, 0.0
    %v330 = vmax.f32 %v166, 0.0
    %v331 = vmax.f32 %v258, 0.0
    %v332 = vmax.f32 %v169, 0.0
    %v333 = vmax.f32 %v261, 0.0
    %v334 = vmax.f32 %v172, 0.0
    %v335 = vmax.f32 %v264, 0.0
    %v336 = vmax.f32 %v175, 0.0
    %v337 = vmax.f32 %v267, 0.0
    %v338 = vmax.f32 %v178, 0.0
    %v339 = vmax.f32 %v270, 0.0
    %v340 = vmax.f32 %v181, 0.0
    %v341 = vmax.f32 %v273, 0.0
    %v342 = vmax.f32 %v184, 0.0
    %v343 = vmax.f32 %v276, 0.0
    %v344 = vmax.f32 %v187, 0.0
    %v345 = vmax.f32 %v279, 0.0
    %v346 = vmax.f32 %v190, 0.0
    %v347 = vmax.f32 %v282, 0.0
    %v348 = vmax.f32 %v193, 0.0
    %v349 = vmax.f32 %v285, 0.0
    %v350 = vmax.f32 %v196, 0.0
    %v351 = vmax.f32 %v288, 0.0
    %v352 = vmax.f32 %v199, 0.0
    %v353 = vmax.f32 %v291, 0.0
    %v354 = vmax.f32 %v202, 0.0
    %v355 = vmax.f32 %v294, 0.0
    %v356 = vmax.f32 %v205, 0.0
    %v357 = vmax.f32 %v297, 0.0
    %v358 = vmax.f32 %v208, 0.0
    %v359 = vmax.f32 %v300, 0.0
    %v360 = vmax.f32 %v211, 0.0
    %v361 = vmax.f32 %v303, 0.0
    %v362 = vmax.f32 %v214, 0.0
    %v363 = vmax.f32 %v306, 0.0
    %v364 = vmax.f32 %v217, 0.0
    %v365 = vmax.f32 %v309, 0.0
    %v366 = vmax.f32 %v220, 0.0
    %v367 = vmax.f32 %v312, 0.0
    %v368 = vmax.f32 %v223, 0.0
    %v369 = vmax.f32 %v315, 0.0
    %v370 = vmax.f32 %v226, 0.0
    %v371 = vmax.f32 %v318, 0.0
    %v372 = vmax.f32 %v229, 0.0
    %v373 = vmax.f32 %v321, 0.0
    %v374 = vmax.f32 %v232, 0.0
    %v375 = vmax.f32 %v324, 0.0
    %v376 = vld [vmem:[%s3] sm:$0xff]
    %v377 = vld [vmem:[%s3 + $0x8] sm:$0xff]
    %v378 = vld [vmem:[%s3 + $0x10] sm:$0xff]
    %v379 = vld [vmem:[%s3 + $0x18] sm:$0xff]
    %v380 = vld [vmem:[%s3 + $0x20] sm:$0xff]
    %v381 = vld [vmem:[%s3 + $0x28] sm:$0xff]
    %v382 = vld [vmem:[%s3 + $0x30] sm:$0xff]
    %v383 = vld [vmem:[%s3 + $0x38] sm:$0xff]
    %v384 = vld [vmem:[%s3 + $0x40] sm:$0xff]
    %v385 = vld [vmem:[%s3 + $0x48] sm:$0xff]
    %v386 = vld [vmem:[%s3 + $0x50] sm:$0xff]
    %v387 = vld [vmem:[%s3 + $0x58] sm:$0xff]
    %v388 = vld [vmem:[%s3 + $0x60] sm:$0xff]
    %v389 = vld [vmem:[%s3 + $0x68] sm:$0xff]
    %v390 = vld [vmem:[%s3 + $0x70] sm:$0xff]
    %v391 = vld [vmem:[%s3 + $0x78] sm:$0xff]
    %v392 = vld [vmem:[%s3 + $0x80] sm:$0xff]
    %v393 = vld [vmem:[%s3 + $0x88] sm:$0xff]
    %v394 = vld [vmem:[%s3 + $0x90] sm:$0xff]
    %v395 = vld [vmem:[%s3 + $0x98] sm:$0xff]
    %v396 = vld [vmem:[%s3 + $0xa0] sm:$0xff]
    %v397 = vld [vmem:[%s3 + $0xa8] sm:$0xff]
    %v398 = vld [vmem:[%s3 + $0xb0] sm:$0xff]
    %v399 = vld [vmem:[%s3 + $0xb8] sm:$0xff]
    %v400 = vld [vmem:[%s3 + $0xc0] sm:$0xff]
    %v401 = vld [vmem:[%s3 + $0xc8] sm:$0xff]
    %v402 = vld [vmem:[%s3 + $0xd0] sm:$0xff]
    %v403 = vld [vmem:[%s3 + $0xd8] sm:$0xff]
    %v404 = vld [vmem:[%s3 + $0xe0] sm:$0xff]
    %v405 = vld [vmem:[%s3 + $0xe8] sm:$0xff]
    %v406 = vld [vmem:[%s3 + $0xf0] sm:$0xff]
    %v407 = vld [vmem:[%s3 + $0xf8] sm:$0xff]
    %v408 = vld [vmem:[%s4] sm:$0x1]
    %v410 = vperm.slane %v408, 0
    %412 = vmatpush.msra.mxu0 %v391
    %413 = vmatpush.msra.mxu0 %v390
    %414 = vmatpush.msra.mxu0 %v389
    %415 = vmatpush.msra.mxu0 %v388
    %416 = vmatpush.msra.mxu0 %v387
    %417 = vmatpush.msra.mxu0 %v386
    %418 = vmatpush.msra.mxu0 %v385
    %419 = vmatpush.msra.mxu0 %v384
    %420 = vmatpush.msra.mxu0 %v383
    %421 = vmatpush.msra.mxu0 %v382
    %422 = vmatpush.msra.mxu0 %v381
    %423 = vmatpush.msra.mxu0 %v380
    %424 = vmatpush.msra.mxu0 %v379
    %425 = vmatpush.msra.mxu0 %v378
    %426 = vmatpush.msra.mxu0 %v377
    %427 = vmatpush.msra.mxu0 %v376
    %428 = vmatmul.f32.gmra.mxu0 %v326
    %v429 = vpop.f32.mrf.mxu0
    %v430 = vadd.f32 %v410, %v429
    %431 = vmatmul.f32.gmra.mxu0 %v328
    %v432 = vpop.f32.mrf.mxu0
    %v433 = vadd.f32 %v410, %v432
    %434 = vmatmul.f32.gmra.mxu0 %v330
    %v435 = vpop.f32.mrf.mxu0
    %v436 = vadd.f32 %v410, %v435
    %437 = vmatmul.f32.gmra.mxu0 %v332
    %v438 = vpop.f32.mrf.mxu0
    %v439 = vadd.f32 %v410, %v438
    %440 = vmatmul.f32.gmra.mxu0 %v334
    %v441 = vpop.f32.mrf.mxu0
    %v442 = vadd.f32 %v410, %v441
    %443 = vmatmul.f32.gmra.mxu0 %v336
    %v444 = vpop.f32.mrf.mxu0
    %v445 = vadd.f32 %v410, %v444
    %446 = vmatmul.f32.gmra.mxu0 %v338
    %v447 = vpop.f32.mrf.mxu0
    %v448 = vadd.f32 %v410, %v447
    %449 = vmatmul.f32.gmra.mxu0 %v340
    %v450 = vpop.f32.mrf.mxu0
    %v451 = vadd.f32 %v410, %v450
    %452 = vmatmul.f32.gmra.mxu0 %v342
    %v453 = vpop.f32.mrf.mxu0
    %v454 = vadd.f32 %v410, %v453
    %455 = vmatmul.f32.gmra.mxu0 %v344
    %v456 = vpop.f32.mrf.mxu0
    %v457 = vadd.f32 %v410, %v456
    %458 = vmatmul.f32.gmra.mxu0 %v346
    %v459 = vpop.f32.mrf.mxu0
    %v460 = vadd.f32 %v410, %v459
    %461 = vmatmul.f32.gmra.mxu0 %v348
    %v462 = vpop.f32.mrf.mxu0
    %v463 = vadd.f32 %v410, %v462
    %464 = vmatmul.f32.gmra.mxu0 %v350
    %v465 = vpop.f32.mrf.mxu0
    %v466 = vadd.f32 %v410, %v465
    %467 = vmatmul.f32.gmra.mxu0 %v352
    %v468 = vpop.f32.mrf.mxu0
    %v469 = vadd.f32 %v410, %v468
    %470 = vmatmul.f32.gmra.mxu0 %v354
    %v471 = vpop.f32.mrf.mxu0
    %v472 = vadd.f32 %v410, %v471
    %473 = vmatmul.f32.gmra.mxu0 %v356
    %v474 = vpop.f32.mrf.mxu0
    %v475 = vadd.f32 %v410, %v474
    %476 = vmatmul.f32.gmra.mxu0 %v358
    %v477 = vpop.f32.mrf.mxu0
    %v478 = vadd.f32 %v410, %v477
    %479 = vmatmul.f32.gmra.mxu0 %v360
    %v480 = vpop.f32.mrf.mxu0
    %v481 = vadd.f32 %v410, %v480
    %482 = vmatmul.f32.gmra.mxu0 %v362
    %v483 = vpop.f32.mrf.mxu0
    %v484 = vadd.f32 %v410, %v483
    %485 = vmatmul.f32.gmra.mxu0 %v364
    %v486 = vpop.f32.mrf.mxu0
    %v487 = vadd.f32 %v410, %v486
    %488 = vmatmul.f32.gmra.mxu0 %v366
    %v489 = vpop.f32.mrf.mxu0
    %v490 = vadd.f32 %v410, %v489
    %491 = vmatmul.f32.gmra.mxu0 %v368
    %v492 = vpop.f32.mrf.mxu0
    %v493 = vadd.f32 %v410, %v492
    %494 = vmatmul.f32.gmra.mxu0 %v370
    %v495 = vpop.f32.mrf.mxu0
    %v496 = vadd.f32 %v410, %v495
    %497 = vmatmul.f32.gmra.mxu0 %v372
    %v498 = vpop.f32.mrf.mxu0
    %v499 = vadd.f32 %v410, %v498
    %500 = vmatmul.f32.gmra.mxu0 %v374
    %v501 = vpop.f32.mrf.mxu0
    %v502 = vadd.f32 %v410, %v501
    %503 = vdwg.mxu0
    %504 = vmatpush.msra.mxu0 %v407
    %505 = vmatpush.msra.mxu0 %v406
    %506 = vmatpush.msra.mxu0 %v405
    %507 = vmatpush.msra.mxu0 %v404
    %508 = vmatpush.msra.mxu0 %v403
    %509 = vmatpush.msra.mxu0 %v402
    %510 = vmatpush.msra.mxu0 %v401
    %511 = vmatpush.msra.mxu0 %v400
    %512 = vmatpush.msra.mxu0 %v399
    %513 = vmatpush.msra.mxu0 %v398
    %514 = vmatpush.msra.mxu0 %v397
    %515 = vmatpush.msra.mxu0 %v396
    %516 = vmatpush.msra.mxu0 %v395
    %517 = vmatpush.msra.mxu0 %v394
    %518 = vmatpush.msra.mxu0 %v393
    %519 = vmatpush.msra.mxu0 %v392
    %520 = vmatmul.f32.gmra.mxu0 %v327
    %v521 = vpop.f32.mrf.mxu0
    %v522 = vadd.f32 %v430, %v521
    %523 = vmatmul.f32.gmra.mxu0 %v329
    %v524 = vpop.f32.mrf.mxu0
    %v525 = vadd.f32 %v433, %v524
    %526 = vmatmul.f32.gmra.mxu0 %v331
    %v527 = vpop.f32.mrf.mxu0
    %v528 = vadd.f32 %v436, %v527
    %529 = vmatmul.f32.gmra.mxu0 %v333
    %v530 = vpop.f32.mrf.mxu0
    %v531 = vadd.f32 %v439, %v530
    %532 = vmatmul.f32.gmra.mxu0 %v335
    %v533 = vpop.f32.mrf.mxu0
    %v534 = vadd.f32 %v442, %v533
    %535 = vmatmul.f32.gmra.mxu0 %v337
    %v536 = vpop.f32.mrf.mxu0
    %v537 = vadd.f32 %v445, %v536
    %538 = vmatmul.f32.gmra.mxu0 %v339
    %v539 = vpop.f32.mrf.mxu0
    %v540 = vadd.f32 %v448, %v539
    %541 = vmatmul.f32.gmra.mxu0 %v341
    %v542 = vpop.f32.mrf.mxu0
    %v543 = vadd.f32 %v451, %v542
    %544 = vmatmul.f32.gmra.mxu0 %v343
    %v545 = vpop.f32.mrf.mxu0
    %v546 = vadd.f32 %v454, %v545
    %547 = vmatmul.f32.gmra.mxu0 %v345
    %v548 = vpop.f32.mrf.mxu0
    %v549 = vadd.f32 %v457, %v548
    %550 = vmatmul.f32.gmra.mxu0 %v347
    %v551 = vpop.f32.mrf.mxu0
    %v552 = vadd.f32 %v460, %v551
    %553 = vmatmul.f32.gmra.mxu0 %v349
    %v554 = vpop.f32.mrf.mxu0
    %v555 = vadd.f32 %v463, %v554
    %556 = vmatmul.f32.gmra.mxu0 %v351
    %v557 = vpop.f32.mrf.mxu0
    %v558 = vadd.f32 %v466, %v557
    %559 = vmatmul.f32.gmra.mxu0 %v353
    %v560 = vpop.f32.mrf.mxu0
    %v561 = vadd.f32 %v469, %v560
    %562 = vmatmul.f32.gmra.mxu0 %v355
    %v563 = vpop.f32.mrf.mxu0
    %v564 = vadd.f32 %v472, %v563
    %565 = vmatmul.f32.gmra.mxu0 %v357
    %v566 = vpop.f32.mrf.mxu0
    %v567 = vadd.f32 %v475, %v566
    %568 = vmatmul.f32.gmra.mxu0 %v359
    %v569 = vpop.f32.mrf.mxu0
    %v570 = vadd.f32 %v478, %v569
    %571 = vmatmul.f32.gmra.mxu0 %v361
    %v572 = vpop.f32.mrf.mxu0
    %v573 = vadd.f32 %v481, %v572
    %574 = vmatmul.f32.gmra.mxu0 %v363
    %v575 = vpop.f32.mrf.mxu0
    %v576 = vadd.f32 %v484, %v575
    %577 = vmatmul.f32.gmra.mxu0 %v365
    %v578 = vpop.f32.mrf.mxu0
    %v579 = vadd.f32 %v487, %v578
    %580 = vmatmul.f32.gmra.mxu0 %v367
    %v581 = vpop.f32.mrf.mxu0
    %v582 = vadd.f32 %v490, %v581
    %583 = vmatmul.f32.gmra.mxu0 %v369
    %v584 = vpop.f32.mrf.mxu0
    %v585 = vadd.f32 %v493, %v584
    %586 = vmatmul.f32.gmra.mxu0 %v371
    %v587 = vpop.f32.mrf.mxu0
    %v588 = vadd.f32 %v496, %v587
    %589 = vmatmul.f32.gmra.mxu0 %v373
    %v590 = vpop.f32.mrf.mxu0
    %v591 = vadd.f32 %v499, %v590
    %592 = vmatmul.f32.gmra.mxu0 %v375
    %v593 = vpop.f32.mrf.mxu0
    %v594 = vadd.f32 %v502, %v593
    %595 = vdwg.mxu0
    %v596 = vmax.f32 %v522, 0.0
    %v597 = vmax.f32 %v525, 0.0
    %v598 = vmax.f32 %v528, 0.0
    %v599 = vmax.f32 %v531, 0.0
    %v600 = vmax.f32 %v534, 0.0
    %v601 = vmax.f32 %v537, 0.0
    %v602 = vmax.f32 %v540, 0.0
    %v603 = vmax.f32 %v543, 0.0
    %v604 = vmax.f32 %v546, 0.0
    %v605 = vmax.f32 %v549, 0.0
    %v606 = vmax.f32 %v552, 0.0
    %v607 = vmax.f32 %v555, 0.0
    %v608 = vmax.f32 %v558, 0.0
    %v609 = vmax.f32 %v561, 0.0
    %v610 = vmax.f32 %v564, 0.0
    %v611 = vmax.f32 %v567, 0.0
    %v612 = vmax.f32 %v570, 0.0
    %v613 = vmax.f32 %v573, 0.0
    %v614 = vmax.f32 %v576, 0.0
    %v615 = vmax.f32 %v579, 0.0
    %v616 = vmax.f32 %v582, 0.0
    %v617 = vmax.f32 %v585, 0.0
    %v618 = vmax.f32 %v588, 0.0
    %v619 = vmax.f32 %v591, 0.0
    %v620 = vmax.f32 %v594, 0.0
    %v621 = vld [vmem:[%s5] sm:$0xff]
    %v622 = vld [vmem:[%s5 + $0x8] sm:$0xff]
    %v623 = vld [vmem:[%s5 + $0x10] sm:$0xff]
    %v624 = vld [vmem:[%s5 + $0x18] sm:$0xff]
    %v625 = vld [vmem:[%s5 + $0x20] sm:$0xff]
    %v626 = vld [vmem:[%s5 + $0x28] sm:$0xff]
    %v627 = vld [vmem:[%s5 + $0x30] sm:$0xff]
    %v628 = vld [vmem:[%s5 + $0x38] sm:$0xff]
    %v629 = vld [vmem:[%s6] sm:$0x1]
    %v631 = vperm.slane %v629, 0
    %vm633 = vcmask 523264
    %v635 = vsel %vm633, %v596, 0
    %v638 = vsel %vm633, %v597, 0
    %v641 = vsel %vm633, %v598, 0
    %v644 = vsel %vm633, %v599, 0
    %v647 = vsel %vm633, %v600, 0
    %v650 = vsel %vm633, %v601, 0
    %v653 = vsel %vm633, %v602, 0
    %v656 = vsel %vm633, %v603, 0
    %v659 = vsel %vm633, %v604, 0
    %v662 = vsel %vm633, %v605, 0
    %v665 = vsel %vm633, %v606, 0
    %v668 = vsel %vm633, %v607, 0
    %v671 = vsel %vm633, %v608, 0
    %v674 = vsel %vm633, %v609, 0
    %v677 = vsel %vm633, %v610, 0
    %v680 = vsel %vm633, %v611, 0
    %v683 = vsel %vm633, %v612, 0
    %v686 = vsel %vm633, %v613, 0
    %v689 = vsel %vm633, %v614, 0
    %v692 = vsel %vm633, %v615, 0
    %v695 = vsel %vm633, %v616, 0
    %v698 = vsel %vm633, %v617, 0
    %v701 = vsel %vm633, %v618, 0
    %v704 = vsel %vm633, %v619, 0
    %v707 = vsel %vm633, %v620, 0
    %709 = vmatpush.msra.mxu0 0.0
    %710 = vmatpush.msra.mxu0 0.0
    %711 = vmatpush.msra.mxu0 0.0
    %712 = vmatpush.msra.mxu0 0.0
    %713 = vmatpush.msra.mxu0 0.0
    %714 = vmatpush.msra.mxu0 0.0
    %715 = vmatpush.msra.mxu0 0.0
    %716 = vmatpush.msra.mxu0 0.0
    %717 = vmatpush.msra.mxu0 %v628
    %718 = vmatpush.msra.mxu0 %v627
    %719 = vmatpush.msra.mxu0 %v626
    %720 = vmatpush.msra.mxu0 %v625
    %721 = vmatpush.msra.mxu0 %v624
    %722 = vmatpush.msra.mxu0 %v623
    %723 = vmatpush.msra.mxu0 %v622
    %724 = vmatpush.msra.mxu0 %v621
    %725 = vmatmul.f32.gmra.mxu0 %v635
    %v726 = vpop.f32.mrf.mxu0
    %v727 = vadd.f32 %v631, %v726
    %728 = vmatmul.f32.gmra.mxu0 %v638
    %v729 = vpop.f32.mrf.mxu0
    %v730 = vadd.f32 %v631, %v729
    %731 = vmatmul.f32.gmra.mxu0 %v641
    %v732 = vpop.f32.mrf.mxu0
    %v733 = vadd.f32 %v631, %v732
    %734 = vmatmul.f32.gmra.mxu0 %v644
    %v735 = vpop.f32.mrf.mxu0
    %v736 = vadd.f32 %v631, %v735
    %737 = vmatmul.f32.gmra.mxu0 %v647
    %v738 = vpop.f32.mrf.mxu0
    %v739 = vadd.f32 %v631, %v738
    %740 = vmatmul.f32.gmra.mxu0 %v650
    %v741 = vpop.f32.mrf.mxu0
    %v742 = vadd.f32 %v631, %v741
    %743 = vmatmul.f32.gmra.mxu0 %v653
    %v744 = vpop.f32.mrf.mxu0
    %v745 = vadd.f32 %v631, %v744
    %746 = vmatmul.f32.gmra.mxu0 %v656
    %v747 = vpop.f32.mrf.mxu0
    %v748 = vadd.f32 %v631, %v747
    %749 = vmatmul.f32.gmra.mxu0 %v659
    %v750 = vpop.f32.mrf.mxu0
    %v751 = vadd.f32 %v631, %v750
    %752 = vmatmul.f32.gmra.mxu0 %v662
    %v753 = vpop.f32.mrf.mxu0
    %v754 = vadd.f32 %v631, %v753
    %755 = vmatmul.f32.gmra.mxu0 %v665
    %v756 = vpop.f32.mrf.mxu0
    %v757 = vadd.f32 %v631, %v756
    %758 = vmatmul.f32.gmra.mxu0 %v668
    %v759 = vpop.f32.mrf.mxu0
    %v760 = vadd.f32 %v631, %v759
    %761 = vmatmul.f32.gmra.mxu0 %v671
    %v762 = vpop.f32.mrf.mxu0
    %v763 = vadd.f32 %v631, %v762
    %764 = vmatmul.f32.gmra.mxu0 %v674
    %v765 = vpop.f32.mrf.mxu0
    %v766 = vadd.f32 %v631, %v765
    %767 = vmatmul.f32.gmra.mxu0 %v677
    %v768 = vpop.f32.mrf.mxu0
    %v769 = vadd.f32 %v631, %v768
    %770 = vmatmul.f32.gmra.mxu0 %v680
    %v771 = vpop.f32.mrf.mxu0
    %v772 = vadd.f32 %v631, %v771
    %773 = vmatmul.f32.gmra.mxu0 %v683
    %v774 = vpop.f32.mrf.mxu0
    %v775 = vadd.f32 %v631, %v774
    %776 = vmatmul.f32.gmra.mxu0 %v686
    %v777 = vpop.f32.mrf.mxu0
    %v778 = vadd.f32 %v631, %v777
    %779 = vmatmul.f32.gmra.mxu0 %v689
    %v780 = vpop.f32.mrf.mxu0
    %v781 = vadd.f32 %v631, %v780
    %782 = vmatmul.f32.gmra.mxu0 %v692
    %v783 = vpop.f32.mrf.mxu0
    %v784 = vadd.f32 %v631, %v783
    %785 = vmatmul.f32.gmra.mxu0 %v695
    %v786 = vpop.f32.mrf.mxu0
    %v787 = vadd.f32 %v631, %v786
    %788 = vmatmul.f32.gmra.mxu0 %v698
    %v789 = vpop.f32.mrf.mxu0
    %v790 = vadd.f32 %v631, %v789
    %791 = vmatmul.f32.gmra.mxu0 %v701
    %v792 = vpop.f32.mrf.mxu0
    %v793 = vadd.f32 %v631, %v792
    %794 = vmatmul.f32.gmra.mxu0 %v704
    %v795 = vpop.f32.mrf.mxu0
    %v796 = vadd.f32 %v631, %v795
    %797 = vmatmul.f32.gmra.mxu0 %v707
    %v798 = vpop.f32.mrf.mxu0
    %v799 = vadd.f32 %v631, %v798
    %800 = vdwg.mxu0
    %801 = vst [vmem:[#allocation2] sm:$0xff] %v727
    %802 = vst [vmem:[#allocation2 + $0x8] sm:$0xff] %v730
    %803 = vst [vmem:[#allocation2 + $0x10] sm:$0xff] %v733
    %804 = vst [vmem:[#allocation2 + $0x18] sm:$0xff] %v736
    %805 = vst [vmem:[#allocation2 + $0x20] sm:$0xff] %v739
    %806 = vst [vmem:[#allocation2 + $0x28] sm:$0xff] %v742
    %807 = vst [vmem:[#allocation2 + $0x30] sm:$0xff] %v745
    %808 = vst [vmem:[#allocation2 + $0x38] sm:$0xff] %v748
    %809 = vst [vmem:[#allocation2 + $0x40] sm:$0xff] %v751
    %810 = vst [vmem:[#allocation2 + $0x48] sm:$0xff] %v754
    %811 = vst [vmem:[#allocation2 + $0x50] sm:$0xff] %v757
    %812 = vst [vmem:[#allocation2 + $0x58] sm:$0xff] %v760
    %813 = vst [vmem:[#allocation2 + $0x60] sm:$0xff] %v763
    %814 = vst [vmem:[#allocation2 + $0x68] sm:$0xff] %v766
    %815 = vst [vmem:[#allocation2 + $0x70] sm:$0xff] %v769
    %816 = vst [vmem:[#allocation2 + $0x78] sm:$0xff] %v772
    %817 = vst [vmem:[#allocation2 + $0x80] sm:$0xff] %v775
    %818 = vst [vmem:[#allocation2 + $0x88] sm:$0xff] %v778
    %819 = vst [vmem:[#allocation2 + $0x90] sm:$0xff] %v781
    %820 = vst [vmem:[#allocation2 + $0x98] sm:$0xff] %v784
    %821 = vst [vmem:[#allocation2 + $0xa0] sm:$0xff] %v787
    %822 = vst [vmem:[#allocation2 + $0xa8] sm:$0xff] %v790
    %823 = vst [vmem:[#allocation2 + $0xb0] sm:$0xff] %v793
    %824 = vst [vmem:[#allocation2 + $0xb8] sm:$0xff] %v796
    %825 = vst [vmem:[#allocation2 + $0xc0] sm:$0xff] %v799
    // Predicated region
    $region30: #{tpu_custom_call.1} parent=1 // pred_check
      _
    $region31: #{tpu_custom_call.1} parent=1 // pred_check_branch
      %827 = sbr.rel (0) target = $region33
    $region32: #{tpu_custom_call.1} parent=1 // pred_region
      %829 = vsyncadd [#allocation3], 0
      %s830 = sshll.u32 [#allocation2], 4
      %s831 = int_to_ptr.vmem [resolvable:$true] %s830
      %s832 = sshll.u32 %s7, 4
      %s833 = int_to_ptr.hbm [resolvable:$true] %s832
      %838 = dma.vmem_to_hbm [thread:$0]  %s831, 3200, %s833, [#allocation3], 128, 128, 8
    $region33: #{tpu_custom_call.1} parent=1 // pred_fallthru
      _
    // Predicated region
    $region34: #{tpu_custom_call.1} parent=1 // pred_check
      _
    $region35: #{tpu_custom_call.1} parent=1 // pred_check_branch
      %840 = sbr.rel (0) target = $region37
    $region36: #{tpu_custom_call.1} parent=1 // pred_region
      %842 = dma.done [#allocation3], 3200
    $region37: #{tpu_custom_call.1} parent=1 // pred_fallthru
      _
    %843 = vsyncpa [#allocation3], 1

</llo_original>
